<compile_context>
chip_gen: v7x
topology: tpu7x:2x2x1
jax: 0.10.0
libtpu: 0.0.40
codegen_flags: <defaults>
</compile_context>

<pallas_src>
import functools

import jax
import jax.numpy as jnp
from jax.experimental import pallas as pl
from jax.experimental.pallas import tpu as pltpu

LANE = 128


def _round_up(n, m):
    return ((n + m - 1) // m) * m


def _pad_to(a, shape):
    pads = [(0, t - s) for s, t in zip(a.shape, shape)]
    return jnp.pad(a, pads)


def _mlp_kernel(x_ref,
                w0_ref, b0_ref,
                w1_ref, b1_ref,
                w2_ref, b2_ref,
                w3_ref, b3_ref,
                w4_ref, b4_ref,
                w5_ref, b5_ref,
                o_ref, *, num_cls):
    """ModelF forward on one (TB, image_size) batch tile. Weights are VMEM-resident."""

    def layer(h, w_ref, b_ref):
        # bf16 x bf16 -> f32 accumulate on the MXU; elementwise math in f32.
        z = jnp.dot(h.astype(jnp.bfloat16), w_ref[...],
                    preferred_element_type=jnp.float32)
        return jax.nn.sigmoid(z + b_ref[...])    # b is (1, out) -> broadcasts

    h = x_ref[...]                                # (TB, image_size) bf16
    h = layer(h, w0_ref, b0_ref)                  # (TB, 128)
    h = layer(h, w1_ref, b1_ref)                  # (TB, 128)  (64 real + pad)
    h = layer(h, w2_ref, b2_ref)                  # (TB, 128)  (10 real + pad)
    h = layer(h, w3_ref, b3_ref)                  # (TB, 128)
    h = layer(h, w4_ref, b4_ref)                  # (TB, 128)
    h = layer(h, w5_ref, b5_ref)                  # (TB, ncp)  (num_cls real + pad)

    # Drop padded logit lanes, then log_softmax over the class dim (== torch
    # F.log_softmax default dim for 2-D input).
    logits = h[:, :num_cls]
    m = jnp.max(logits, axis=-1, keepdims=True)
    z = logits - m
    lse = jnp.log(jnp.sum(jnp.exp(z), axis=-1, keepdims=True))
    o_ref[...] = (z - lse).astype(o_ref.dtype)


def model_f_forward(x, params, *, block_rows=512):
    """x: any shape reshapeable to (-1, image_size). Returns (batch, num_cls) f32."""
    image_size = params["w0"].shape[0]
    num_cls = params["w5"].shape[1]
    ncp = _round_up(num_cls, LANE)               # lane-padded class dim

    x2d = x.reshape(-1, image_size).astype(jnp.bfloat16)
    batch = x2d.shape[0]
    # Batch tile: multiple-of-128 rows when the batch is large; exact fit when
    # small (block == full dim satisfies the (8,128) rule).
    tb = block_rows if batch > block_rows else batch

    # Lane-pad the narrow layers to 128 so every MXU tile is full/unmasked.
    dims_in = [image_size, 128, 128, 128, 128, 128]
    dims_out = [128, 128, 128, 128, 128, ncp]

    flat_args = [x2d]
    in_specs = [pl.BlockSpec((tb, image_size), lambda i: (i, 0))]
    for l in range(6):
        w = params[f"w{l}"]
        b = params[f"b{l}"].reshape(1, -1)
        wp = _pad_to(w, (dims_in[l], dims_out[l])).astype(jnp.bfloat16)
        bp = _pad_to(b, (1, dims_out[l])).astype(jnp.float32)
        flat_args += [wp, bp]
        in_specs += [pl.BlockSpec(wp.shape, lambda i: (0, 0)),
                     pl.BlockSpec(bp.shape, lambda i: (0, 0))]

    out_shape = jax.ShapeDtypeStruct((batch, num_cls), jnp.float32)
    kernel = functools.partial(_mlp_kernel, num_cls=num_cls)

    return pl.pallas_call(
        kernel,
        out_shape=out_shape,
        grid=(pl.cdiv(batch, tb),),
        in_specs=in_specs,
        out_specs=pl.BlockSpec((tb, num_cls), lambda i: (i, 0)),
        compiler_params=pltpu.CompilerParams(
            dimension_semantics=("parallel",)),   # megacore batch sharding on v7x
    )(*flat_args)


def init_params(image_size, num_cls=10):
    """Deterministic xavier-uniform-style init matching ModelF's layer shapes."""
    dims = [image_size, 128, 64, 10, 10, 10, num_cls]
    params = {}
    key = jax.random.PRNGKey(42)
    for i in range(6):
        fan_in, fan_out = dims[i], dims[i + 1]
        key, kw = jax.random.split(key)
        limit = (6.0 / (fan_in + fan_out)) ** 0.5
        # Stored as (in, out) == transpose of torch's nn.Linear weight.
        params[f"w{i}"] = jax.random.uniform(
            kw, (fan_in, fan_out), jnp.float32, -limit, limit)
        params[f"b{i}"] = jnp.zeros((fan_out,), jnp.float32)
    return params


def reference_forward(x, params):
    """Pure-JAX f32 reference for correctness checking."""
    image_size = params["w0"].shape[0]
    h = x.reshape(-1, image_size).astype(jnp.float32)
    for i in range(6):
        h = jax.nn.sigmoid(h @ params[f"w{i}"] + params[f"b{i}"])
    return jax.nn.log_softmax(h, axis=-1)


if __name__ == "__main__":
    image_size = 16 * 16   # flattened 16x16 grayscale image
    num_cls = 10

    params = init_params(image_size, num_cls)
    key = jax.random.PRNGKey(0)

    # Small-shape check (single tile, tb == batch).
    batch = 2
    x = jax.random.normal(key, (batch, 1, 16, 16), jnp.float32)
    out = jax.block_until_ready(model_f_forward(x, params))
    ref = reference_forward(x, params)
    assert out.shape == (batch, num_cls)
    # bf16 matmul inputs (f32 accumulate) -> slightly looser tolerance vs f32 ref.
    assert jnp.allclose(out, ref, atol=2e-2, rtol=2e-2), "mismatch vs reference (small)"

    # Tiled-path check: multiple grid steps + partial last block.
    batch2 = 600
    x2 = jax.random.normal(jax.random.PRNGKey(1), (batch2, image_size), jnp.float32)
    out2 = jax.block_until_ready(model_f_forward(x2, params))
    ref2 = reference_forward(x2, params)
    assert out2.shape == (batch2, num_cls)
    assert jnp.allclose(out2, ref2, atol=2e-2, rtol=2e-2), "mismatch vs reference (tiled)"

    print("KERNEL_OK")
</pallas_src>

<mosaic_0001>
module attributes {stable_mosaic.version = 11 : i64} {
  func.func @_mlp_kernel(%arg0: i32, %arg1: memref<2x256xbf16, #tpu.memory_space<vmem>>, %arg2: memref<256x128xbf16, #tpu.memory_space<vmem>>, %arg3: memref<1x128xf32, #tpu.memory_space<vmem>>, %arg4: memref<128x128xbf16, #tpu.memory_space<vmem>>, %arg5: memref<1x128xf32, #tpu.memory_space<vmem>>, %arg6: memref<128x128xbf16, #tpu.memory_space<vmem>>, %arg7: memref<1x128xf32, #tpu.memory_space<vmem>>, %arg8: memref<128x128xbf16, #tpu.memory_space<vmem>>, %arg9: memref<1x128xf32, #tpu.memory_space<vmem>>, %arg10: memref<128x128xbf16, #tpu.memory_space<vmem>>, %arg11: memref<1x128xf32, #tpu.memory_space<vmem>>, %arg12: memref<128x128xbf16, #tpu.memory_space<vmem>>, %arg13: memref<1x128xf32, #tpu.memory_space<vmem>>, %arg14: memref<2x10xf32, #tpu.memory_space<vmem>>) attributes {dimension_semantics = [#tpu.dimension_semantics<parallel>], iteration_bounds = array<i64: 1>, scalar_prefetch = 0 : i64, scratch_operands = 0 : i64, tpu.core_type = #tpu.core_type<tc>, window_params = [{transform_indices = @transform_0, window_bounds = array<i64: 2, 256>}, {pipeline_mode = #tpu.pipeline_mode<synchronous>, transform_indices = @transform_1, window_bounds = array<i64: 256, 128>}, {pipeline_mode = #tpu.pipeline_mode<synchronous>, transform_indices = @transform_2, window_bounds = array<i64: 1, 128>}, {pipeline_mode = #tpu.pipeline_mode<synchronous>, transform_indices = @transform_3, window_bounds = array<i64: 128, 128>}, {pipeline_mode = #tpu.pipeline_mode<synchronous>, transform_indices = @transform_4, window_bounds = array<i64: 1, 128>}, {pipeline_mode = #tpu.pipeline_mode<synchronous>, transform_indices = @transform_5, window_bounds = array<i64: 128, 128>}, {pipeline_mode = #tpu.pipeline_mode<synchronous>, transform_indices = @transform_6, window_bounds = array<i64: 1, 128>}, {pipeline_mode = #tpu.pipeline_mode<synchronous>, transform_indices = @transform_7, window_bounds = array<i64: 128, 128>}, {pipeline_mode = #tpu.pipeline_mode<synchronous>, transform_indices = @transform_8, window_bounds = array<i64: 1, 128>}, {pipeline_mode = #tpu.pipeline_mode<synchronous>, transform_indices = @transform_9, window_bounds = array<i64: 128, 128>}, {pipeline_mode = #tpu.pipeline_mode<synchronous>, transform_indices = @transform_10, window_bounds = array<i64: 1, 128>}, {pipeline_mode = #tpu.pipeline_mode<synchronous>, transform_indices = @transform_11, window_bounds = array<i64: 128, 128>}, {pipeline_mode = #tpu.pipeline_mode<synchronous>, transform_indices = @transform_12, window_bounds = array<i64: 1, 128>}, {transform_indices = @transform_13, window_bounds = array<i64: 2, 10>}]} {
    %c0 = arith.constant 0 : index
    %c0_0 = arith.constant 0 : index
    %0 = vector.load %arg1[%c0, %c0_0] : memref<2x256xbf16, #tpu.memory_space<vmem>>, vector<2x256xbf16>
    %c0_1 = arith.constant 0 : index
    %c0_2 = arith.constant 0 : index
    %1 = vector.load %arg2[%c0_1, %c0_2] : memref<256x128xbf16, #tpu.memory_space<vmem>>, vector<256x128xbf16>
    %cst = arith.constant dense<0.000000e+00> : vector<2x128xf32>
    %2 = tpu.matmul %0, %1, %cst {dimension_numbers = #tpu.dot_dimension_numbers<[1], [0], [0], [1], [0, 0, 1, 1], [], []>} : vector<2x256xbf16>, vector<256x128xbf16>, vector<2x128xf32> -> vector<2x128xf32>
    %c0_3 = arith.constant 0 : index
    %c0_4 = arith.constant 0 : index
    %3 = vector.load %arg3[%c0_3, %c0_4] : memref<1x128xf32, #tpu.memory_space<vmem>>, vector<1x128xf32>
    %4 = vector.broadcast %3 : vector<1x128xf32> to vector<2x128xf32>
    %5 = arith.addf %2, %4 : vector<2x128xf32>
    %6 = arith.negf %5 : vector<2x128xf32>
    %7 = math.exp %6 : vector<2x128xf32>
    %cst_5 = arith.constant 1.000000e+00 : f32
    %8 = vector.broadcast %cst_5 : f32 to vector<2x128xf32>
    %9 = arith.addf %8, %7 : vector<2x128xf32>
    %10 = arith.divf %8, %9 : vector<2x128xf32>
    %11 = arith.truncf %10 : vector<2x128xf32> to vector<2x128xbf16>
    %c0_6 = arith.constant 0 : index
    %c0_7 = arith.constant 0 : index
    %12 = vector.load %arg4[%c0_6, %c0_7] : memref<128x128xbf16, #tpu.memory_space<vmem>>, vector<128x128xbf16>
    %cst_8 = arith.constant dense<0.000000e+00> : vector<2x128xf32>
    %13 = tpu.matmul %11, %12, %cst_8 {dimension_numbers = #tpu.dot_dimension_numbers<[1], [0], [0], [1], [0, 0, 1, 1], [], []>} : vector<2x128xbf16>, vector<128x128xbf16>, vector<2x128xf32> -> vector<2x128xf32>
    %c0_9 = arith.constant 0 : index
    %c0_10 = arith.constant 0 : index
    %14 = vector.load %arg5[%c0_9, %c0_10] : memref<1x128xf32, #tpu.memory_space<vmem>>, vector<1x128xf32>
    %15 = vector.broadcast %14 : vector<1x128xf32> to vector<2x128xf32>
    %16 = arith.addf %13, %15 : vector<2x128xf32>
    %17 = arith.negf %16 : vector<2x128xf32>
    %18 = math.exp %17 : vector<2x128xf32>
    %cst_11 = arith.constant 1.000000e+00 : f32
    %19 = vector.broadcast %cst_11 : f32 to vector<2x128xf32>
    %20 = arith.addf %19, %18 : vector<2x128xf32>
    %21 = arith.divf %19, %20 : vector<2x128xf32>
    %22 = arith.truncf %21 : vector<2x128xf32> to vector<2x128xbf16>
    %c0_12 = arith.constant 0 : index
    %c0_13 = arith.constant 0 : index
    %23 = vector.load %arg6[%c0_12, %c0_13] : memref<128x128xbf16, #tpu.memory_space<vmem>>, vector<128x128xbf16>
    %cst_14 = arith.constant dense<0.000000e+00> : vector<2x128xf32>
    %24 = tpu.matmul %22, %23, %cst_14 {dimension_numbers = #tpu.dot_dimension_numbers<[1], [0], [0], [1], [0, 0, 1, 1], [], []>} : vector<2x128xbf16>, vector<128x128xbf16>, vector<2x128xf32> -> vector<2x128xf32>
    %c0_15 = arith.constant 0 : index
    %c0_16 = arith.constant 0 : index
    %25 = vector.load %arg7[%c0_15, %c0_16] : memref<1x128xf32, #tpu.memory_space<vmem>>, vector<1x128xf32>
    %26 = vector.broadcast %25 : vector<1x128xf32> to vector<2x128xf32>
    %27 = arith.addf %24, %26 : vector<2x128xf32>
    %28 = arith.negf %27 : vector<2x128xf32>
    %29 = math.exp %28 : vector<2x128xf32>
    %cst_17 = arith.constant 1.000000e+00 : f32
    %30 = vector.broadcast %cst_17 : f32 to vector<2x128xf32>
    %31 = arith.addf %30, %29 : vector<2x128xf32>
    %32 = arith.divf %30, %31 : vector<2x128xf32>
    %33 = arith.truncf %32 : vector<2x128xf32> to vector<2x128xbf16>
    %c0_18 = arith.constant 0 : index
    %c0_19 = arith.constant 0 : index
    %34 = vector.load %arg8[%c0_18, %c0_19] : memref<128x128xbf16, #tpu.memory_space<vmem>>, vector<128x128xbf16>
    %cst_20 = arith.constant dense<0.000000e+00> : vector<2x128xf32>
    %35 = tpu.matmul %33, %34, %cst_20 {dimension_numbers = #tpu.dot_dimension_numbers<[1], [0], [0], [1], [0, 0, 1, 1], [], []>} : vector<2x128xbf16>, vector<128x128xbf16>, vector<2x128xf32> -> vector<2x128xf32>
    %c0_21 = arith.constant 0 : index
    %c0_22 = arith.constant 0 : index
    %36 = vector.load %arg9[%c0_21, %c0_22] : memref<1x128xf32, #tpu.memory_space<vmem>>, vector<1x128xf32>
    %37 = vector.broadcast %36 : vector<1x128xf32> to vector<2x128xf32>
    %38 = arith.addf %35, %37 : vector<2x128xf32>
    %39 = arith.negf %38 : vector<2x128xf32>
    %40 = math.exp %39 : vector<2x128xf32>
    %cst_23 = arith.constant 1.000000e+00 : f32
    %41 = vector.broadcast %cst_23 : f32 to vector<2x128xf32>
    %42 = arith.addf %41, %40 : vector<2x128xf32>
    %43 = arith.divf %41, %42 : vector<2x128xf32>
    %44 = arith.truncf %43 : vector<2x128xf32> to vector<2x128xbf16>
    %c0_24 = arith.constant 0 : index
    %c0_25 = arith.constant 0 : index
    %45 = vector.load %arg10[%c0_24, %c0_25] : memref<128x128xbf16, #tpu.memory_space<vmem>>, vector<128x128xbf16>
    %cst_26 = arith.constant dense<0.000000e+00> : vector<2x128xf32>
    %46 = tpu.matmul %44, %45, %cst_26 {dimension_numbers = #tpu.dot_dimension_numbers<[1], [0], [0], [1], [0, 0, 1, 1], [], []>} : vector<2x128xbf16>, vector<128x128xbf16>, vector<2x128xf32> -> vector<2x128xf32>
    %c0_27 = arith.constant 0 : index
    %c0_28 = arith.constant 0 : index
    %47 = vector.load %arg11[%c0_27, %c0_28] : memref<1x128xf32, #tpu.memory_space<vmem>>, vector<1x128xf32>
    %48 = vector.broadcast %47 : vector<1x128xf32> to vector<2x128xf32>
    %49 = arith.addf %46, %48 : vector<2x128xf32>
    %50 = arith.negf %49 : vector<2x128xf32>
    %51 = math.exp %50 : vector<2x128xf32>
    %cst_29 = arith.constant 1.000000e+00 : f32
    %52 = vector.broadcast %cst_29 : f32 to vector<2x128xf32>
    %53 = arith.addf %52, %51 : vector<2x128xf32>
    %54 = arith.divf %52, %53 : vector<2x128xf32>
    %55 = arith.truncf %54 : vector<2x128xf32> to vector<2x128xbf16>
    %c0_30 = arith.constant 0 : index
    %c0_31 = arith.constant 0 : index
    %56 = vector.load %arg12[%c0_30, %c0_31] : memref<128x128xbf16, #tpu.memory_space<vmem>>, vector<128x128xbf16>
    %cst_32 = arith.constant dense<0.000000e+00> : vector<2x128xf32>
    %57 = tpu.matmul %55, %56, %cst_32 {dimension_numbers = #tpu.dot_dimension_numbers<[1], [0], [0], [1], [0, 0, 1, 1], [], []>} : vector<2x128xbf16>, vector<128x128xbf16>, vector<2x128xf32> -> vector<2x128xf32>
    %c0_33 = arith.constant 0 : index
    %c0_34 = arith.constant 0 : index
    %58 = vector.load %arg13[%c0_33, %c0_34] : memref<1x128xf32, #tpu.memory_space<vmem>>, vector<1x128xf32>
    %59 = vector.broadcast %58 : vector<1x128xf32> to vector<2x128xf32>
    %60 = arith.addf %57, %59 : vector<2x128xf32>
    %61 = arith.negf %60 : vector<2x128xf32>
    %62 = math.exp %61 : vector<2x128xf32>
    %cst_35 = arith.constant 1.000000e+00 : f32
    %63 = vector.broadcast %cst_35 : f32 to vector<2x128xf32>
    %64 = arith.addf %63, %62 : vector<2x128xf32>
    %65 = arith.divf %63, %64 : vector<2x128xf32>
    %66 = vector.extract_strided_slice %65 {offsets = [0, 0], sizes = [2, 10], strides = [1, 1]} : vector<2x128xf32> to vector<2x10xf32>
    %cst_36 = arith.constant dense<0xFF800000> : vector<2xf32>
    %67 = vector.multi_reduction <maximumf>, %66, %cst_36 [1] : vector<2x10xf32> to vector<2xf32>
    %68 = vector.shape_cast %67 : vector<2xf32> to vector<2x1xf32>
    %69 = vector.broadcast %68 : vector<2x1xf32> to vector<2x10xf32>
    %70 = arith.subf %66, %69 : vector<2x10xf32>
    %71 = math.exp %70 : vector<2x10xf32>
    %cst_37 = arith.constant dense<0.000000e+00> : vector<2xf32>
    %72 = vector.multi_reduction <add>, %71, %cst_37 [1] : vector<2x10xf32> to vector<2xf32>
    %73 = vector.shape_cast %72 : vector<2xf32> to vector<2x1xf32>
    %74 = math.log %73 : vector<2x1xf32>
    %75 = vector.broadcast %74 : vector<2x1xf32> to vector<2x10xf32>
    %76 = arith.subf %70, %75 : vector<2x10xf32>
    %c0_38 = arith.constant 0 : index
    %c0_39 = arith.constant 0 : index
    %77 = vector.load %arg14[%c0_38, %c0_39] : memref<2x10xf32, #tpu.memory_space<vmem>>, vector<2x10xf32>
    tpu.vector_store %arg14[%c0_38, %c0_39], %76 {strides = array<i32>} : memref<2x10xf32, #tpu.memory_space<vmem>>, vector<2x10xf32>,
    return
  }
  func.func @transform_0(%arg0: i32) -> (i32, i32) {
    %c0_i32 = arith.constant 0 : i32
    %c0_i32_0 = arith.constant 0 : i32
    return %arg0, %c0_i32 : i32, i32
  }
  func.func @transform_1(%arg0: i32) -> (i32, i32) {
    %c0_i32 = arith.constant 0 : i32
    %c0_i32_0 = arith.constant 0 : i32
    %c0_i32_1 = arith.constant 0 : i32
    return %c0_i32, %c0_i32_0 : i32, i32
  }
  func.func @transform_2(%arg0: i32) -> (i32, i32) {
    %c0_i32 = arith.constant 0 : i32
    %c0_i32_0 = arith.constant 0 : i32
    %c0_i32_1 = arith.constant 0 : i32
    return %c0_i32, %c0_i32_0 : i32, i32
  }
  func.func @transform_3(%arg0: i32) -> (i32, i32) {
    %c0_i32 = arith.constant 0 : i32
    %c0_i32_0 = arith.constant 0 : i32
    %c0_i32_1 = arith.constant 0 : i32
    return %c0_i32, %c0_i32_0 : i32, i32
  }
  func.func @transform_4(%arg0: i32) -> (i32, i32) {
    %c0_i32 = arith.constant 0 : i32
    %c0_i32_0 = arith.constant 0 : i32
    %c0_i32_1 = arith.constant 0 : i32
    return %c0_i32, %c0_i32_0 : i32, i32
  }
  func.func @transform_5(%arg0: i32) -> (i32, i32) {
    %c0_i32 = arith.constant 0 : i32
    %c0_i32_0 = arith.constant 0 : i32
    %c0_i32_1 = arith.constant 0 : i32
    return %c0_i32, %c0_i32_0 : i32, i32
  }
  func.func @transform_6(%arg0: i32) -> (i32, i32) {
    %c0_i32 = arith.constant 0 : i32
    %c0_i32_0 = arith.constant 0 : i32
    %c0_i32_1 = arith.constant 0 : i32
    return %c0_i32, %c0_i32_0 : i32, i32
  }
  func.func @transform_7(%arg0: i32) -> (i32, i32) {
    %c0_i32 = arith.constant 0 : i32
    %c0_i32_0 = arith.constant 0 : i32
    %c0_i32_1 = arith.constant 0 : i32
    return %c0_i32, %c0_i32_0 : i32, i32
  }
  func.func @transform_8(%arg0: i32) -> (i32, i32) {
    %c0_i32 = arith.constant 0 : i32
    %c0_i32_0 = arith.constant 0 : i32
    %c0_i32_1 = arith.constant 0 : i32
    return %c0_i32, %c0_i32_0 : i32, i32
  }
  func.func @transform_9(%arg0: i32) -> (i32, i32) {
    %c0_i32 = arith.constant 0 : i32
    %c0_i32_0 = arith.constant 0 : i32
    %c0_i32_1 = arith.constant 0 : i32
    return %c0_i32, %c0_i32_0 : i32, i32
  }
  func.func @transform_10(%arg0: i32) -> (i32, i32) {
    %c0_i32 = arith.constant 0 : i32
    %c0_i32_0 = arith.constant 0 : i32
    %c0_i32_1 = arith.constant 0 : i32
    return %c0_i32, %c0_i32_0 : i32, i32
  }
  func.func @transform_11(%arg0: i32) -> (i32, i32) {
    %c0_i32 = arith.constant 0 : i32
    %c0_i32_0 = arith.constant 0 : i32
    %c0_i32_1 = arith.constant 0 : i32
    return %c0_i32, %c0_i32_0 : i32, i32
  }
  func.func @transform_12(%arg0: i32) -> (i32, i32) {
    %c0_i32 = arith.constant 0 : i32
    %c0_i32_0 = arith.constant 0 : i32
    %c0_i32_1 = arith.constant 0 : i32
    return %c0_i32, %c0_i32_0 : i32, i32
  }
  func.func @transform_13(%arg0: i32) -> (i32, i32) {
    %c0_i32 = arith.constant 0 : i32
    %c0_i32_0 = arith.constant 0 : i32
    return %arg0, %c0_i32 : i32, i32
  }
}

</mosaic_0001>

<llo_original>
// kernel: tpu_custom_call.1
$region0: #{tpu_custom_call.1}
  #allocation0 [shape = 'u32[]', space=smem, size = 0x4, offset = 0x4, fixed_abs, tag = 'smem constant byte address 0x4 - core index']
  #allocation1 [shape = 'u32[144,128]{1,0:T(1,128)}', space=vmem, size = 0x12000, scoped, tag = 'internal scratch']
  %s0 = inlined_call_operand.hbm [shape: bf16[2,256], index: 0, kind: input, shape index: {}]
  %s1 = inlined_call_operand.hbm [shape: bf16[256,128], index: 1, kind: input, shape index: {}]
  %s2 = inlined_call_operand.vmem [shape: f32[1,128], index: 2, kind: input, shape index: {}]
  %s3 = inlined_call_operand.hbm [shape: bf16[128,128], index: 3, kind: input, shape index: {}]
  %s4 = inlined_call_operand.vmem [shape: f32[1,128], index: 4, kind: input, shape index: {}]
  %s5 = inlined_call_operand.hbm [shape: bf16[128,128], index: 5, kind: input, shape index: {}]
  %s6 = inlined_call_operand.vmem [shape: f32[1,128], index: 6, kind: input, shape index: {}]
  %s7 = inlined_call_operand.hbm [shape: bf16[128,128], index: 7, kind: input, shape index: {}]
  %s8 = inlined_call_operand.vmem [shape: f32[1,128], index: 8, kind: input, shape index: {}]
  %s9 = inlined_call_operand.hbm [shape: bf16[128,128], index: 9, kind: input, shape index: {}]
  %s10 = inlined_call_operand.vmem [shape: f32[1,128], index: 10, kind: input, shape index: {}]
  %s11 = inlined_call_operand.hbm [shape: bf16[128,128], index: 11, kind: input, shape index: {}]
  %s12 = inlined_call_operand.vmem [shape: f32[1,128], index: 12, kind: input, shape index: {}]
  %s13 = inlined_call_operand.hbm [shape: f32[2,10], index: 13, kind: output, shape index: {}]
  %s14 = sld [smem:[#allocation0]]
  $region90: #{tpu_custom_call.1} parent=0
    _
  %s16 = ssub.s32 1, %s14
  %s17 = scalar_select 0, %s16, %s14
  $region1: #{tpu_custom_call.1} parent=0
    #allocation2 [shape = 'u8[1024]{0}', space=vmem, size = 0x400, scoped, tag = 'input window, operand 0, single buffered']
    #allocation3 [shape = 's32[1]{0}', space=sflag, size = 0x4, scoped, tag = 'scoped memory for tpu_custom_call.1']
    #allocation4 [shape = 's32[1]{0}', space=sflag, size = 0x4, scoped, tag = 'scoped memory for tpu_custom_call.1']
    #allocation5 [shape = 'u8[65536]{0}', space=vmem, size = 0x10000, scoped, tag = 'input window, operand 1, single buffered']
    #allocation6 [shape = 's32[1]{0}', space=sflag, size = 0x4, scoped, tag = 'scoped memory for tpu_custom_call.1']
    #allocation7 [shape = 'u8[32768]{0}', space=vmem, size = 0x8000, scoped, tag = 'input window, operand 3, single buffered']
    #allocation8 [shape = 'u8[32768]{0}', space=vmem, size = 0x8000, scoped, tag = 'input window, operand 5, single buffered']
    #allocation9 [shape = 's32[1]{0}', space=sflag, size = 0x4, scoped, tag = 'scoped memory for tpu_custom_call.1']
    #allocation10 [shape = 'u8[32768]{0}', space=vmem, size = 0x8000, scoped, tag = 'input window, operand 7, single buffered']
    #allocation11 [shape = 'u8[32768]{0}', space=vmem, size = 0x8000, scoped, tag = 'input window, operand 9, single buffered']
    #allocation12 [shape = 's32[1]{0}', space=sflag, size = 0x4, scoped, tag = 'scoped memory for tpu_custom_call.1']
    #allocation13 [shape = 'u8[32768]{0}', space=vmem, size = 0x8000, scoped, tag = 'input window, operand 11, single buffered']
    #allocation14 [shape = 'u8[1024]{0}', space=vmem, size = 0x400, scoped, tag = 'output window, operand 0, single buffered']
    %18 = vsyncpa [#allocation3], 0
    %19 = vsyncpa [#allocation6], 0
    %20 = vsyncpa [#allocation9], 0
    %21 = vsyncpa [#allocation12], 0
    %22 = vsyncpa [#allocation4], 0
    // Predicated region
    $region2: #{tpu_custom_call.1} parent=1 // pred_check
      _
    $region3: #{tpu_custom_call.1} parent=1 // pred_check_branch
      %24 = sbr.rel (0) target = $region5
    $region4: #{tpu_custom_call.1} parent=1 // pred_region
      %s26 = ssub.s32 32, 32
      %27 = vsyncadd [#allocation3], %s26
      %s29 = sshll.u32 [#allocation2], 4
      %s30 = int_to_ptr.vmem [resolvable:$true] %s29
      %32 = dma.hbm_to_vmem [thread:$0]  %s0, 32, %s30, [#allocation3]
    $region5: #{tpu_custom_call.1} parent=1 // pred_fallthru
      _
    // Predicated region
    $region6: #{tpu_custom_call.1} parent=1 // pred_check
      _
    $region7: #{tpu_custom_call.1} parent=1 // pred_check_branch
      %34 = sbr.rel (0) target = $region9
    $region8: #{tpu_custom_call.1} parent=1 // pred_region
      %s36 = ssub.s32 2048, 2048
      %37 = vsyncadd [#allocation6], %s36
      %s38 = sshll.u32 [#allocation5], 4
      %s39 = int_to_ptr.vmem [resolvable:$true] %s38
      %44 = dma.hbm_to_vmem [thread:$0]  %s1, 2048, %s39, [#allocation6], 64, 64, 4
    $region9: #{tpu_custom_call.1} parent=1 // pred_fallthru
      _
    // Predicated region
    $region10: #{tpu_custom_call.1} parent=1 // pred_check
      _
    $region11: #{tpu_custom_call.1} parent=1 // pred_check_branch
      %46 = sbr.rel (0) target = $region13
    $region12: #{tpu_custom_call.1} parent=1 // pred_region
      _
    $region13: #{tpu_custom_call.1} parent=1 // pred_fallthru
      _
    // Predicated region
    $region14: #{tpu_custom_call.1} parent=1 // pred_check
      _
    $region15: #{tpu_custom_call.1} parent=1 // pred_check_branch
      %48 = sbr.rel (0) target = $region17
    $region16: #{tpu_custom_call.1} parent=1 // pred_region
      %s50 = ssub.s32 1024, 1024
      %51 = vsyncadd [#allocation6], %s50
      %s52 = sshll.u32 [#allocation7], 4
      %s53 = int_to_ptr.vmem [resolvable:$true] %s52
      %58 = dma.hbm_to_vmem [thread:$0]  %s3, 1024, %s53, [#allocation6], 64, 64, 4
    $region17: #{tpu_custom_call.1} parent=1 // pred_fallthru
      _
    // Predicated region
    $region18: #{tpu_custom_call.1} parent=1 // pred_check
      _
    $region19: #{tpu_custom_call.1} parent=1 // pred_check_branch
      %60 = sbr.rel (0) target = $region21
    $region20: #{tpu_custom_call.1} parent=1 // pred_region
      _
    $region21: #{tpu_custom_call.1} parent=1 // pred_fallthru
      _
    // Predicated region
    $region22: #{tpu_custom_call.1} parent=1 // pred_check
      _
    $region23: #{tpu_custom_call.1} parent=1 // pred_check_branch
      %62 = sbr.rel (0) target = $region25
    $region24: #{tpu_custom_call.1} parent=1 // pred_region
      %s64 = ssub.s32 1024, 1024
      %65 = vsyncadd [#allocation9], %s64
      %s66 = sshll.u32 [#allocation8], 4
      %s67 = int_to_ptr.vmem [resolvable:$true] %s66
      %72 = dma.hbm_to_vmem [thread:$0]  %s5, 1024, %s67, [#allocation9], 64, 64, 4
    $region25: #{tpu_custom_call.1} parent=1 // pred_fallthru
      _
    // Predicated region
    $region26: #{tpu_custom_call.1} parent=1 // pred_check
      _
    $region27: #{tpu_custom_call.1} parent=1 // pred_check_branch
      %74 = sbr.rel (0) target = $region29
    $region28: #{tpu_custom_call.1} parent=1 // pred_region
      _
    $region29: #{tpu_custom_call.1} parent=1 // pred_fallthru
      _
    // Predicated region
    $region30: #{tpu_custom_call.1} parent=1 // pred_check
      _
    $region31: #{tpu_custom_call.1} parent=1 // pred_check_branch
      %76 = sbr.rel (0) target = $region33
    $region32: #{tpu_custom_call.1} parent=1 // pred_region
      %s78 = ssub.s32 1024, 1024
      %79 = vsyncadd [#allocation9], %s78
      %s80 = sshll.u32 [#allocation10], 4
      %s81 = int_to_ptr.vmem [resolvable:$true] %s80
      %86 = dma.hbm_to_vmem [thread:$0]  %s7, 1024, %s81, [#allocation9], 64, 64, 4
    $region33: #{tpu_custom_call.1} parent=1 // pred_fallthru
      _
    // Predicated region
    $region34: #{tpu_custom_call.1} parent=1 // pred_check
      _
    $region35: #{tpu_custom_call.1} parent=1 // pred_check_branch
      %88 = sbr.rel (0) target = $region37
    $region36: #{tpu_custom_call.1} parent=1 // pred_region
      _
    $region37: #{tpu_custom_call.1} parent=1 // pred_fallthru
      _
    // Predicated region
    $region38: #{tpu_custom_call.1} parent=1 // pred_check
      _
    $region39: #{tpu_custom_call.1} parent=1 // pred_check_branch
      %90 = sbr.rel (0) target = $region41
    $region40: #{tpu_custom_call.1} parent=1 // pred_region
      %s92 = ssub.s32 1024, 1024
      %93 = vsyncadd [#allocation12], %s92
      %s94 = sshll.u32 [#allocation11], 4
      %s95 = int_to_ptr.vmem [resolvable:$true] %s94
      %100 = dma.hbm_to_vmem [thread:$0]  %s9, 1024, %s95, [#allocation12], 64, 64, 4
    $region41: #{tpu_custom_call.1} parent=1 // pred_fallthru
      _
    // Predicated region
    $region42: #{tpu_custom_call.1} parent=1 // pred_check
      _
    $region43: #{tpu_custom_call.1} parent=1 // pred_check_branch
      %102 = sbr.rel (0) target = $region45
    $region44: #{tpu_custom_call.1} parent=1 // pred_region
      _
    $region45: #{tpu_custom_call.1} parent=1 // pred_fallthru
      _
    // Predicated region
    $region46: #{tpu_custom_call.1} parent=1 // pred_check
      _
    $region47: #{tpu_custom_call.1} parent=1 // pred_check_branch
      %104 = sbr.rel (0) target = $region49
    $region48: #{tpu_custom_call.1} parent=1 // pred_region
      %s106 = ssub.s32 1024, 1024
      %107 = vsyncadd [#allocation12], %s106
      %s108 = sshll.u32 [#allocation13], 4
      %s109 = int_to_ptr.vmem [resolvable:$true] %s108
      %114 = dma.hbm_to_vmem [thread:$0]  %s11, 1024, %s109, [#allocation12], 64, 64, 4
    $region49: #{tpu_custom_call.1} parent=1 // pred_fallthru
      _
    // Predicated region
    $region50: #{tpu_custom_call.1} parent=1 // pred_check
      _
    $region51: #{tpu_custom_call.1} parent=1 // pred_check_branch
      %116 = sbr.rel (0) target = $region53
    $region52: #{tpu_custom_call.1} parent=1 // pred_region
      _
    $region53: #{tpu_custom_call.1} parent=1 // pred_fallthru
      _
    // Predicated region
    $region54: #{tpu_custom_call.1} parent=1 // pred_check
      _
    $region55: #{tpu_custom_call.1} parent=1 // pred_check_branch
      %118 = sbr.rel (0) target = $region57
    $region56: #{tpu_custom_call.1} parent=1 // pred_region
      %119 = dma.done [#allocation3], 32
    $region57: #{tpu_custom_call.1} parent=1 // pred_fallthru
      _
    // Predicated region
    $region58: #{tpu_custom_call.1} parent=1 // pred_check
      _
    $region59: #{tpu_custom_call.1} parent=1 // pred_check_branch
      %121 = sbr.rel (0) target = $region61
    $region60: #{tpu_custom_call.1} parent=1 // pred_region
      %122 = dma.done [#allocation6], 2048
    $region61: #{tpu_custom_call.1} parent=1 // pred_fallthru
      _
    // Predicated region
    $region62: #{tpu_custom_call.1} parent=1 // pred_check
      _
    $region63: #{tpu_custom_call.1} parent=1 // pred_check_branch
      %124 = sbr.rel (0) target = $region65
    $region64: #{tpu_custom_call.1} parent=1 // pred_region
      %125 = dma.done [#allocation6], 1024
    $region65: #{tpu_custom_call.1} parent=1 // pred_fallthru
      _
    // Predicated region
    $region66: #{tpu_custom_call.1} parent=1 // pred_check
      _
    $region67: #{tpu_custom_call.1} parent=1 // pred_check_branch
      %127 = sbr.rel (0) target = $region69
    $region68: #{tpu_custom_call.1} parent=1 // pred_region
      %128 = dma.done [#allocation9], 1024
    $region69: #{tpu_custom_call.1} parent=1 // pred_fallthru
      _
    // Predicated region
    $region70: #{tpu_custom_call.1} parent=1 // pred_check
      _
    $region71: #{tpu_custom_call.1} parent=1 // pred_check_branch
      %130 = sbr.rel (0) target = $region73
    $region72: #{tpu_custom_call.1} parent=1 // pred_region
      %131 = dma.done [#allocation9], 1024
    $region73: #{tpu_custom_call.1} parent=1 // pred_fallthru
      _
    // Predicated region
    $region74: #{tpu_custom_call.1} parent=1 // pred_check
      _
    $region75: #{tpu_custom_call.1} parent=1 // pred_check_branch
      %133 = sbr.rel (0) target = $region77
    $region76: #{tpu_custom_call.1} parent=1 // pred_region
      %134 = dma.done [#allocation12], 1024
    $region77: #{tpu_custom_call.1} parent=1 // pred_fallthru
      _
    // Predicated region
    $region78: #{tpu_custom_call.1} parent=1 // pred_check
      _
    $region79: #{tpu_custom_call.1} parent=1 // pred_check_branch
      %136 = sbr.rel (0) target = $region81
    $region80: #{tpu_custom_call.1} parent=1 // pred_region
      %137 = dma.done [#allocation12], 1024
    $region81: #{tpu_custom_call.1} parent=1 // pred_fallthru
      _
    %v139 = vld [vmem:[#allocation2] sm:$0x3]
    %v140 = vld [vmem:[#allocation5] sm:$0xf]
    %v141 = vld [vmem:[#allocation5 + $0x4] sm:$0xf]
    %v142 = vld [vmem:[#allocation5 + $0x8] sm:$0xf]
    %v143 = vld [vmem:[#allocation5 + $0xc] sm:$0xf]
    %v144 = vld [vmem:[#allocation5 + $0x10] sm:$0xf]
    %v145 = vld [vmem:[#allocation5 + $0x14] sm:$0xf]
    %v146 = vld [vmem:[#allocation5 + $0x18] sm:$0xf]
    %v147 = vld [vmem:[#allocation5 + $0x1c] sm:$0xf]
    %v148 = vld [vmem:[#allocation5 + $0x20] sm:$0xf]
    %v149 = vld [vmem:[#allocation5 + $0x24] sm:$0xf]
    %v150 = vld [vmem:[#allocation5 + $0x28] sm:$0xf]
    %v151 = vld [vmem:[#allocation5 + $0x2c] sm:$0xf]
    %v152 = vld [vmem:[#allocation5 + $0x30] sm:$0xf]
    %v153 = vld [vmem:[#allocation5 + $0x34] sm:$0xf]
    %v154 = vld [vmem:[#allocation5 + $0x38] sm:$0xf]
    %v155 = vld [vmem:[#allocation5 + $0x3c] sm:$0xf]
    %v156 = vld [vmem:[#allocation5 + $0x40] sm:$0xf]
    %v157 = vld [vmem:[#allocation5 + $0x44] sm:$0xf]
    %v158 = vld [vmem:[#allocation5 + $0x48] sm:$0xf]
    %v159 = vld [vmem:[#allocation5 + $0x4c] sm:$0xf]
    %v160 = vld [vmem:[#allocation5 + $0x50] sm:$0xf]
    %v161 = vld [vmem:[#allocation5 + $0x54] sm:$0xf]
    %v162 = vld [vmem:[#allocation5 + $0x58] sm:$0xf]
    %v163 = vld [vmem:[#allocation5 + $0x5c] sm:$0xf]
    %v164 = vld [vmem:[#allocation5 + $0x60] sm:$0xf]
    %v165 = vld [vmem:[#allocation5 + $0x64] sm:$0xf]
    %v166 = vld [vmem:[#allocation5 + $0x68] sm:$0xf]
    %v167 = vld [vmem:[#allocation5 + $0x6c] sm:$0xf]
    %v168 = vld [vmem:[#allocation5 + $0x70] sm:$0xf]
    %v169 = vld [vmem:[#allocation5 + $0x74] sm:$0xf]
    %v170 = vld [vmem:[#allocation5 + $0x78] sm:$0xf]
    %v171 = vld [vmem:[#allocation5 + $0x7c] sm:$0xf]
    %v172 = vld [vmem:[%s2] sm:$0x1]
    %v174 = vlaneseq
    %v175 = vshrl.u32 %v174, 7
    %v176 = vsub.s32 0, %v175
    %v177 = vrot.slane %v172, %v176
    %v181 = vunpack.c.l.s4 1966171168
    %v182 = vunpack.c.0.s8 %v181
    %v183 = vlaneseq
    %v184 = vshrl.u32 %v183, 7
    %v185 = vsub.s32 %v182, %v184
    %v186 = vrot.slane %v139, %v185
    %v187 = vcombine.high %v186, %v186
    %v189 = vunpack.c.l.s4 1966171168
    %v190 = vunpack.c.0.s8 %v189
    %v191 = vlaneseq
    %v192 = vshrl.u32 %v191, 7
    %v193 = vsub.s32 %v190, %v192
    %v194 = vrot.slane %v186, %v193
    %v196 = vunpack.c.l.s4 1966171168
    %v197 = vunpack.c.0.s8 %v196
    %v198 = vlaneseq
    %v199 = vshrl.u32 %v198, 7
    %v200 = vsub.s32 %v197, %v199
    %v201 = vrot.slane %v187, %v200
    %v236 = vunpack.c.l.b16 %v140
    %v237 = vunpack.c.l.b16 %v141
    %v238 = vunpack.c.l.b16 %v142
    %v239 = vunpack.c.l.b16 %v143
    %v240 = vunpack.c.l.b16 %v144
    %v241 = vunpack.c.l.b16 %v145
    %v242 = vunpack.c.l.b16 %v146
    %v243 = vunpack.c.l.b16 %v147
    %v244 = vunpack.c.l.b16 %v148
    %v245 = vunpack.c.l.b16 %v149
    %v246 = vunpack.c.l.b16 %v150
    %v247 = vunpack.c.l.b16 %v151
    %v248 = vunpack.c.l.b16 %v152
    %v249 = vunpack.c.l.b16 %v153
    %v250 = vunpack.c.l.b16 %v154
    %v251 = vunpack.c.l.b16 %v155
    %v252 = vunpack.c.l.b16 %v156
    %v253 = vunpack.c.l.b16 %v157
    %v254 = vunpack.c.l.b16 %v158
    %v255 = vunpack.c.l.b16 %v159
    %v256 = vunpack.c.l.b16 %v160
    %v257 = vunpack.c.l.b16 %v161
    %v258 = vunpack.c.l.b16 %v162
    %v259 = vunpack.c.l.b16 %v163
    %v260 = vunpack.c.l.b16 %v164
    %v261 = vunpack.c.l.b16 %v165
    %v262 = vunpack.c.l.b16 %v166
    %v263 = vunpack.c.l.b16 %v167
    %v264 = vunpack.c.l.b16 %v168
    %v265 = vunpack.c.l.b16 %v169
    %v266 = vunpack.c.l.b16 %v170
    %v267 = vunpack.c.l.b16 %v171
    %v268 = vpack.c.b16 %v237, %v236
    %v269 = vpack.c.b16 %v239, %v238
    %v270 = vpack.c.b16 %v241, %v240
    %v271 = vpack.c.b16 %v243, %v242
    %v272 = vpack.c.b16 %v245, %v244
    %v273 = vpack.c.b16 %v247, %v246
    %v274 = vpack.c.b16 %v249, %v248
    %v275 = vpack.c.b16 %v251, %v250
    %v276 = vpack.c.b16 %v253, %v252
    %v277 = vpack.c.b16 %v255, %v254
    %v278 = vpack.c.b16 %v257, %v256
    %v279 = vpack.c.b16 %v259, %v258
    %v280 = vpack.c.b16 %v261, %v260
    %v281 = vpack.c.b16 %v263, %v262
    %v282 = vpack.c.b16 %v265, %v264
    %v283 = vpack.c.b16 %v267, %v266
    %300 = vmatprep.subr.bf16.mxu0 0
    %301 = vmatpush1.bf16.msra.mxu0 %v268
    %302 = vmatprep.subr.bf16.mxu0 0
    %303 = vmatpush1.bf16.msra.mxu0 %v269
    %304 = vmatprep.subr.bf16.mxu0 0
    %305 = vmatpush1.bf16.msra.mxu0 %v270
    %306 = vmatprep.subr.bf16.mxu0 0
    %307 = vmatpush1.bf16.msra.mxu0 %v271
    %308 = vmatprep.subr.bf16.mxu0 0
    %309 = vmatpush1.bf16.msra.mxu0 %v272
    %310 = vmatprep.subr.bf16.mxu0 0
    %311 = vmatpush1.bf16.msra.mxu0 %v273
    %312 = vmatprep.subr.bf16.mxu0 0
    %313 = vmatpush1.bf16.msra.mxu0 %v274
    %314 = vmatprep.subr.bf16.mxu0 0
    %315 = vmatpush1.bf16.msra.mxu0 %v275
    %316 = vmatprep.subr.bf16.mxu0 0
    %317 = vmatpush1.bf16.msra.mxu0 %v276
    %318 = vmatprep.subr.bf16.mxu0 0
    %319 = vmatpush1.bf16.msra.mxu0 %v277
    %320 = vmatprep.subr.bf16.mxu0 0
    %321 = vmatpush1.bf16.msra.mxu0 %v278
    %322 = vmatprep.subr.bf16.mxu0 0
    %323 = vmatpush1.bf16.msra.mxu0 %v279
    %324 = vmatprep.subr.bf16.mxu0 0
    %325 = vmatpush1.bf16.msra.mxu0 %v280
    %326 = vmatprep.subr.bf16.mxu0 0
    %327 = vmatpush1.bf16.msra.mxu0 %v281
    %328 = vmatprep.subr.bf16.mxu0 0
    %329 = vmatpush1.bf16.msra.mxu0 %v282
    %330 = vmatprep.subr.bf16.mxu0 0
    %331 = vmatpush1.bf16.msra.mxu0 %v283
    %332 = vmatprep.mubr.bf16.mxu0 %v201
    %333 = vmatmul.mubr.bf16.gmra.mrb[0].mxu0 %v194
    %v334 = vpop.f32.mrb[0].mxu0
    %v335 = vadd.f32 %v177, %v334
    %v336 = vpop.f32.mrb[0].mxu0
    %v337 = vpop.f32.mrb[0].mxu0
    %v338 = vpop.f32.mrb[0].mxu0
    %339 = vdwg.mxu0
    %v340 = vxor.u32 %v335, 2147483648
    %v341 = vmul.f32 %v340, 1.442695
    %v342 = vpow.pop %v341
    %v343 = vadd.f32 %v342, 1.0
    %v344 = vrcp.pop %v343
    %v345 = vmul.f32 1.0, %v344
    %v346 = vpack.c.bf16 %v345, %v345
    %v347 = vld [vmem:[#allocation7] sm:$0xf]
    %v348 = vld [vmem:[#allocation7 + $0x4] sm:$0xf]
    %v349 = vld [vmem:[#allocation7 + $0x8] sm:$0xf]
    %v350 = vld [vmem:[#allocation7 + $0xc] sm:$0xf]
    %v351 = vld [vmem:[#allocation7 + $0x10] sm:$0xf]
    %v352 = vld [vmem:[#allocation7 + $0x14] sm:$0xf]
    %v353 = vld [vmem:[#allocation7 + $0x18] sm:$0xf]
    %v354 = vld [vmem:[#allocation7 + $0x1c] sm:$0xf]
    %v355 = vld [vmem:[#allocation7 + $0x20] sm:$0xf]
    %v356 = vld [vmem:[#allocation7 + $0x24] sm:$0xf]
    %v357 = vld [vmem:[#allocation7 + $0x28] sm:$0xf]
    %v358 = vld [vmem:[#allocation7 + $0x2c] sm:$0xf]
    %v359 = vld [vmem:[#allocation7 + $0x30] sm:$0xf]
    %v360 = vld [vmem:[#allocation7 + $0x34] sm:$0xf]
    %v361 = vld [vmem:[#allocation7 + $0x38] sm:$0xf]
    %v362 = vld [vmem:[#allocation7 + $0x3c] sm:$0xf]
    %v363 = vld [vmem:[%s4] sm:$0x1]
    %v365 = vlaneseq
    %v366 = vshrl.u32 %v365, 7
    %v367 = vsub.s32 0, %v366
    %v368 = vrot.slane %v363, %v367
    %v386 = vunpack.c.l.b16 %v347
    %v387 = vunpack.c.l.b16 %v348
    %v388 = vunpack.c.l.b16 %v349
    %v389 = vunpack.c.l.b16 %v350
    %v390 = vunpack.c.l.b16 %v351
    %v391 = vunpack.c.l.b16 %v352
    %v392 = vunpack.c.l.b16 %v353
    %v393 = vunpack.c.l.b16 %v354
    %v394 = vunpack.c.l.b16 %v355
    %v395 = vunpack.c.l.b16 %v356
    %v396 = vunpack.c.l.b16 %v357
    %v397 = vunpack.c.l.b16 %v358
    %v398 = vunpack.c.l.b16 %v359
    %v399 = vunpack.c.l.b16 %v360
    %v400 = vunpack.c.l.b16 %v361
    %v401 = vunpack.c.l.b16 %v362
    %v402 = vpack.c.b16 %v387, %v386
    %v403 = vpack.c.b16 %v389, %v388
    %v404 = vpack.c.b16 %v391, %v390
    %v405 = vpack.c.b16 %v393, %v392
    %v406 = vpack.c.b16 %v395, %v394
    %v407 = vpack.c.b16 %v397, %v396
    %v408 = vpack.c.b16 %v399, %v398
    %v409 = vpack.c.b16 %v401, %v400
    %418 = vmatprep.subr.bf16.mxu0 0
    %419 = vmatpush1.bf16.msra.mxu0 %v402
    %420 = vmatprep.subr.bf16.mxu0 0
    %421 = vmatpush1.bf16.msra.mxu0 %v403
    %422 = vmatprep.subr.bf16.mxu0 0
    %423 = vmatpush1.bf16.msra.mxu0 %v404
    %424 = vmatprep.subr.bf16.mxu0 0
    %425 = vmatpush1.bf16.msra.mxu0 %v405
    %426 = vmatprep.subr.bf16.mxu0 0
    %427 = vmatpush1.bf16.msra.mxu0 %v406
    %428 = vmatprep.subr.bf16.mxu0 0
    %429 = vmatpush1.bf16.msra.mxu0 %v407
    %430 = vmatprep.subr.bf16.mxu0 0
    %431 = vmatpush1.bf16.msra.mxu0 %v408
    %432 = vmatprep.subr.bf16.mxu0 0
    %433 = vmatpush1.bf16.msra.mxu0 %v409
    %434 = vmatprep.subr.bf16.mxu0 0
    %435 = vmatpush1.bf16.msra.mxu0 0
    %436 = vmatprep.subr.bf16.mxu0 0
    %437 = vmatpush1.bf16.msra.mxu0 0
    %438 = vmatprep.subr.bf16.mxu0 0
    %439 = vmatpush1.bf16.msra.mxu0 0
    %440 = vmatprep.subr.bf16.mxu0 0
    %441 = vmatpush1.bf16.msra.mxu0 0
    %442 = vmatprep.subr.bf16.mxu0 0
    %443 = vmatpush1.bf16.msra.mxu0 0
    %444 = vmatprep.subr.bf16.mxu0 0
    %445 = vmatpush1.bf16.msra.mxu0 0
    %446 = vmatprep.subr.bf16.mxu0 0
    %447 = vmatpush1.bf16.msra.mxu0 0
    %448 = vmatprep.subr.bf16.mxu0 0
    %449 = vmatpush1.bf16.msra.mxu0 0
    %450 = vmatprep.mubr.bf16.mxu0 0
    %451 = vmatmul.mubr.bf16.gmra.mrb[0].mxu0 %v346
    %v452 = vpop.f32.mrb[0].mxu0
    %v453 = vadd.f32 %v368, %v452
    %v454 = vpop.f32.mrb[0].mxu0
    %v455 = vpop.f32.mrb[0].mxu0
    %v456 = vpop.f32.mrb[0].mxu0
    %457 = vdwg.mxu0
    %v458 = vxor.u32 %v453, 2147483648
    %v459 = vmul.f32 %v458, 1.442695
    %v460 = vpow.pop %v459
    %v461 = vadd.f32 %v460, 1.0
    %v462 = vrcp.pop %v461
    %v463 = vmul.f32 1.0, %v462
    %v464 = vpack.c.bf16 %v463, %v463
    %v465 = vld [vmem:[#allocation8] sm:$0xf]
    %v466 = vld [vmem:[#allocation8 + $0x4] sm:$0xf]
    %v467 = vld [vmem:[#allocation8 + $0x8] sm:$0xf]
    %v468 = vld [vmem:[#allocation8 + $0xc] sm:$0xf]
    %v469 = vld [vmem:[#allocation8 + $0x10] sm:$0xf]
    %v470 = vld [vmem:[#allocation8 + $0x14] sm:$0xf]
    %v471 = vld [vmem:[#allocation8 + $0x18] sm:$0xf]
    %v472 = vld [vmem:[#allocation8 + $0x1c] sm:$0xf]
    %v473 = vld [vmem:[#allocation8 + $0x20] sm:$0xf]
    %v474 = vld [vmem:[#allocation8 + $0x24] sm:$0xf]
    %v475 = vld [vmem:[#allocation8 + $0x28] sm:$0xf]
    %v476 = vld [vmem:[#allocation8 + $0x2c] sm:$0xf]
    %v477 = vld [vmem:[#allocation8 + $0x30] sm:$0xf]
    %v478 = vld [vmem:[#allocation8 + $0x34] sm:$0xf]
    %v479 = vld [vmem:[#allocation8 + $0x38] sm:$0xf]
    %v480 = vld [vmem:[#allocation8 + $0x3c] sm:$0xf]
    %v481 = vld [vmem:[%s6] sm:$0x1]
    %v483 = vlaneseq
    %v484 = vshrl.u32 %v483, 7
    %v485 = vsub.s32 0, %v484
    %v486 = vrot.slane %v481, %v485
    %v504 = vunpack.c.l.b16 %v465
    %v505 = vunpack.c.l.b16 %v466
    %v506 = vunpack.c.l.b16 %v467
    %v507 = vunpack.c.l.b16 %v468
    %v508 = vunpack.c.l.b16 %v469
    %v509 = vunpack.c.l.b16 %v470
    %v510 = vunpack.c.l.b16 %v471
    %v511 = vunpack.c.l.b16 %v472
    %v512 = vunpack.c.l.b16 %v473
    %v513 = vunpack.c.l.b16 %v474
    %v514 = vunpack.c.l.b16 %v475
    %v515 = vunpack.c.l.b16 %v476
    %v516 = vunpack.c.l.b16 %v477
    %v517 = vunpack.c.l.b16 %v478
    %v518 = vunpack.c.l.b16 %v479
    %v519 = vunpack.c.l.b16 %v480
    %v520 = vpack.c.b16 %v505, %v504
    %v521 = vpack.c.b16 %v507, %v506
    %v522 = vpack.c.b16 %v509, %v508
    %v523 = vpack.c.b16 %v511, %v510
    %v524 = vpack.c.b16 %v513, %v512
    %v525 = vpack.c.b16 %v515, %v514
    %v526 = vpack.c.b16 %v517, %v516
    %v527 = vpack.c.b16 %v519, %v518
    %536 = vmatprep.subr.bf16.mxu0 0
    %537 = vmatpush1.bf16.msra.mxu0 %v520
    %538 = vmatprep.subr.bf16.mxu0 0
    %539 = vmatpush1.bf16.msra.mxu0 %v521
    %540 = vmatprep.subr.bf16.mxu0 0
    %541 = vmatpush1.bf16.msra.mxu0 %v522
    %542 = vmatprep.subr.bf16.mxu0 0
    %543 = vmatpush1.bf16.msra.mxu0 %v523
    %544 = vmatprep.subr.bf16.mxu0 0
    %545 = vmatpush1.bf16.msra.mxu0 %v524
    %546 = vmatprep.subr.bf16.mxu0 0
    %547 = vmatpush1.bf16.msra.mxu0 %v525
    %548 = vmatprep.subr.bf16.mxu0 0
    %549 = vmatpush1.bf16.msra.mxu0 %v526
    %550 = vmatprep.subr.bf16.mxu0 0
    %551 = vmatpush1.bf16.msra.mxu0 %v527
    %552 = vmatprep.subr.bf16.mxu0 0
    %553 = vmatpush1.bf16.msra.mxu0 0
    %554 = vmatprep.subr.bf16.mxu0 0
    %555 = vmatpush1.bf16.msra.mxu0 0
    %556 = vmatprep.subr.bf16.mxu0 0
    %557 = vmatpush1.bf16.msra.mxu0 0
    %558 = vmatprep.subr.bf16.mxu0 0
    %559 = vmatpush1.bf16.msra.mxu0 0
    %560 = vmatprep.subr.bf16.mxu0 0
    %561 = vmatpush1.bf16.msra.mxu0 0
    %562 = vmatprep.subr.bf16.mxu0 0
    %563 = vmatpush1.bf16.msra.mxu0 0
    %564 = vmatprep.subr.bf16.mxu0 0
    %565 = vmatpush1.bf16.msra.mxu0 0
    %566 = vmatprep.subr.bf16.mxu0 0
    %567 = vmatpush1.bf16.msra.mxu0 0
    %568 = vmatprep.mubr.bf16.mxu0 0
    %569 = vmatmul.mubr.bf16.gmra.mrb[0].mxu0 %v464
    %v570 = vpop.f32.mrb[0].mxu0
    %v571 = vadd.f32 %v486, %v570
    %v572 = vpop.f32.mrb[0].mxu0
    %v573 = vpop.f32.mrb[0].mxu0
    %v574 = vpop.f32.mrb[0].mxu0
    %575 = vdwg.mxu0
    %v576 = vxor.u32 %v571, 2147483648
    %v577 = vmul.f32 %v576, 1.442695
    %v578 = vpow.pop %v577
    %v579 = vadd.f32 %v578, 1.0
    %v580 = vrcp.pop %v579
    %v581 = vmul.f32 1.0, %v580
    %v582 = vpack.c.bf16 %v581, %v581
    %v583 = vld [vmem:[#allocation10] sm:$0xf]
    %v584 = vld [vmem:[#allocation10 + $0x4] sm:$0xf]
    %v585 = vld [vmem:[#allocation10 + $0x8] sm:$0xf]
    %v586 = vld [vmem:[#allocation10 + $0xc] sm:$0xf]
    %v587 = vld [vmem:[#allocation10 + $0x10] sm:$0xf]
    %v588 = vld [vmem:[#allocation10 + $0x14] sm:$0xf]
    %v589 = vld [vmem:[#allocation10 + $0x18] sm:$0xf]
    %v590 = vld [vmem:[#allocation10 + $0x1c] sm:$0xf]
    %v591 = vld [vmem:[#allocation10 + $0x20] sm:$0xf]
    %v592 = vld [vmem:[#allocation10 + $0x24] sm:$0xf]
    %v593 = vld [vmem:[#allocation10 + $0x28] sm:$0xf]
    %v594 = vld [vmem:[#allocation10 + $0x2c] sm:$0xf]
    %v595 = vld [vmem:[#allocation10 + $0x30] sm:$0xf]
    %v596 = vld [vmem:[#allocation10 + $0x34] sm:$0xf]
    %v597 = vld [vmem:[#allocation10 + $0x38] sm:$0xf]
    %v598 = vld [vmem:[#allocation10 + $0x3c] sm:$0xf]
    %v599 = vld [vmem:[%s8] sm:$0x1]
    %v601 = vlaneseq
    %v602 = vshrl.u32 %v601, 7
    %v603 = vsub.s32 0, %v602
    %v604 = vrot.slane %v599, %v603
    %v622 = vunpack.c.l.b16 %v583
    %v623 = vunpack.c.l.b16 %v584
    %v624 = vunpack.c.l.b16 %v585
    %v625 = vunpack.c.l.b16 %v586
    %v626 = vunpack.c.l.b16 %v587
    %v627 = vunpack.c.l.b16 %v588
    %v628 = vunpack.c.l.b16 %v589
    %v629 = vunpack.c.l.b16 %v590
    %v630 = vunpack.c.l.b16 %v591
    %v631 = vunpack.c.l.b16 %v592
    %v632 = vunpack.c.l.b16 %v593
    %v633 = vunpack.c.l.b16 %v594
    %v634 = vunpack.c.l.b16 %v595
    %v635 = vunpack.c.l.b16 %v596
    %v636 = vunpack.c.l.b16 %v597
    %v637 = vunpack.c.l.b16 %v598
    %v638 = vpack.c.b16 %v623, %v622
    %v639 = vpack.c.b16 %v625, %v624
    %v640 = vpack.c.b16 %v627, %v626
    %v641 = vpack.c.b16 %v629, %v628
    %v642 = vpack.c.b16 %v631, %v630
    %v643 = vpack.c.b16 %v633, %v632
    %v644 = vpack.c.b16 %v635, %v634
    %v645 = vpack.c.b16 %v637, %v636
    %654 = vmatprep.subr.bf16.mxu0 0
    %655 = vmatpush1.bf16.msra.mxu0 %v638
    %656 = vmatprep.subr.bf16.mxu0 0
    %657 = vmatpush1.bf16.msra.mxu0 %v639
    %658 = vmatprep.subr.bf16.mxu0 0
    %659 = vmatpush1.bf16.msra.mxu0 %v640
    %660 = vmatprep.subr.bf16.mxu0 0
    %661 = vmatpush1.bf16.msra.mxu0 %v641
    %662 = vmatprep.subr.bf16.mxu0 0
    %663 = vmatpush1.bf16.msra.mxu0 %v642
    %664 = vmatprep.subr.bf16.mxu0 0
    %665 = vmatpush1.bf16.msra.mxu0 %v643
    %666 = vmatprep.subr.bf16.mxu0 0
    %667 = vmatpush1.bf16.msra.mxu0 %v644
    %668 = vmatprep.subr.bf16.mxu0 0
    %669 = vmatpush1.bf16.msra.mxu0 %v645
    %670 = vmatprep.subr.bf16.mxu0 0
    %671 = vmatpush1.bf16.msra.mxu0 0
    %672 = vmatprep.subr.bf16.mxu0 0
    %673 = vmatpush1.bf16.msra.mxu0 0
    %674 = vmatprep.subr.bf16.mxu0 0
    %675 = vmatpush1.bf16.msra.mxu0 0
    %676 = vmatprep.subr.bf16.mxu0 0
    %677 = vmatpush1.bf16.msra.mxu0 0
    %678 = vmatprep.subr.bf16.mxu0 0
    %679 = vmatpush1.bf16.msra.mxu0 0
    %680 = vmatprep.subr.bf16.mxu0 0
    %681 = vmatpush1.bf16.msra.mxu0 0
    %682 = vmatprep.subr.bf16.mxu0 0
    %683 = vmatpush1.bf16.msra.mxu0 0
    %684 = vmatprep.subr.bf16.mxu0 0
    %685 = vmatpush1.bf16.msra.mxu0 0
    %686 = vmatprep.mubr.bf16.mxu0 0
    %687 = vmatmul.mubr.bf16.gmra.mrb[0].mxu0 %v582
    %v688 = vpop.f32.mrb[0].mxu0
    %v689 = vadd.f32 %v604, %v688
    %v690 = vpop.f32.mrb[0].mxu0
    %v691 = vpop.f32.mrb[0].mxu0
    %v692 = vpop.f32.mrb[0].mxu0
    %693 = vdwg.mxu0
    %v694 = vxor.u32 %v689, 2147483648
    %v695 = vmul.f32 %v694, 1.442695
    %v696 = vpow.pop %v695
    %v697 = vadd.f32 %v696, 1.0
    %v698 = vrcp.pop %v697
    %v699 = vmul.f32 1.0, %v698
    %v700 = vpack.c.bf16 %v699, %v699
    %v701 = vld [vmem:[#allocation11] sm:$0xf]
    %v702 = vld [vmem:[#allocation11 + $0x4] sm:$0xf]
    %v703 = vld [vmem:[#allocation11 + $0x8] sm:$0xf]
    %v704 = vld [vmem:[#allocation11 + $0xc] sm:$0xf]
    %v705 = vld [vmem:[#allocation11 + $0x10] sm:$0xf]
    %v706 = vld [vmem:[#allocation11 + $0x14] sm:$0xf]
    %v707 = vld [vmem:[#allocation11 + $0x18] sm:$0xf]
    %v708 = vld [vmem:[#allocation11 + $0x1c] sm:$0xf]
    %v709 = vld [vmem:[#allocation11 + $0x20] sm:$0xf]
    %v710 = vld [vmem:[#allocation11 + $0x24] sm:$0xf]
    %v711 = vld [vmem:[#allocation11 + $0x28] sm:$0xf]
    %v712 = vld [vmem:[#allocation11 + $0x2c] sm:$0xf]
    %v713 = vld [vmem:[#allocation11 + $0x30] sm:$0xf]
    %v714 = vld [vmem:[#allocation11 + $0x34] sm:$0xf]
    %v715 = vld [vmem:[#allocation11 + $0x38] sm:$0xf]
    %v716 = vld [vmem:[#allocation11 + $0x3c] sm:$0xf]
    %v717 = vld [vmem:[%s10] sm:$0x1]
    %v719 = vlaneseq
    %v720 = vshrl.u32 %v719, 7
    %v721 = vsub.s32 0, %v720
    %v722 = vrot.slane %v717, %v721
    %v740 = vunpack.c.l.b16 %v701
    %v741 = vunpack.c.l.b16 %v702
    %v742 = vunpack.c.l.b16 %v703
    %v743 = vunpack.c.l.b16 %v704
    %v744 = vunpack.c.l.b16 %v705
    %v745 = vunpack.c.l.b16 %v706
    %v746 = vunpack.c.l.b16 %v707
    %v747 = vunpack.c.l.b16 %v708
    %v748 = vunpack.c.l.b16 %v709
    %v749 = vunpack.c.l.b16 %v710
    %v750 = vunpack.c.l.b16 %v711
    %v751 = vunpack.c.l.b16 %v712
    %v752 = vunpack.c.l.b16 %v713
    %v753 = vunpack.c.l.b16 %v714
    %v754 = vunpack.c.l.b16 %v715
    %v755 = vunpack.c.l.b16 %v716
    %v756 = vpack.c.b16 %v741, %v740
    %v757 = vpack.c.b16 %v743, %v742
    %v758 = vpack.c.b16 %v745, %v744
    %v759 = vpack.c.b16 %v747, %v746
    %v760 = vpack.c.b16 %v749, %v748
    %v761 = vpack.c.b16 %v751, %v750
    %v762 = vpack.c.b16 %v753, %v752
    %v763 = vpack.c.b16 %v755, %v754
    %772 = vmatprep.subr.bf16.mxu0 0
    %773 = vmatpush1.bf16.msra.mxu0 %v756
    %774 = vmatprep.subr.bf16.mxu0 0
    %775 = vmatpush1.bf16.msra.mxu0 %v757
    %776 = vmatprep.subr.bf16.mxu0 0
    %777 = vmatpush1.bf16.msra.mxu0 %v758
    %778 = vmatprep.subr.bf16.mxu0 0
    %779 = vmatpush1.bf16.msra.mxu0 %v759
    %780 = vmatprep.subr.bf16.mxu0 0
    %781 = vmatpush1.bf16.msra.mxu0 %v760
    %782 = vmatprep.subr.bf16.mxu0 0
    %783 = vmatpush1.bf16.msra.mxu0 %v761
    %784 = vmatprep.subr.bf16.mxu0 0
    %785 = vmatpush1.bf16.msra.mxu0 %v762
    %786 = vmatprep.subr.bf16.mxu0 0
    %787 = vmatpush1.bf16.msra.mxu0 %v763
    %788 = vmatprep.subr.bf16.mxu0 0
    %789 = vmatpush1.bf16.msra.mxu0 0
    %790 = vmatprep.subr.bf16.mxu0 0
    %791 = vmatpush1.bf16.msra.mxu0 0
    %792 = vmatprep.subr.bf16.mxu0 0
    %793 = vmatpush1.bf16.msra.mxu0 0
    %794 = vmatprep.subr.bf16.mxu0 0
    %795 = vmatpush1.bf16.msra.mxu0 0
    %796 = vmatprep.subr.bf16.mxu0 0
    %797 = vmatpush1.bf16.msra.mxu0 0
    %798 = vmatprep.subr.bf16.mxu0 0
    %799 = vmatpush1.bf16.msra.mxu0 0
    %800 = vmatprep.subr.bf16.mxu0 0
    %801 = vmatpush1.bf16.msra.mxu0 0
    %802 = vmatprep.subr.bf16.mxu0 0
    %803 = vmatpush1.bf16.msra.mxu0 0
    %804 = vmatprep.mubr.bf16.mxu0 0
    %805 = vmatmul.mubr.bf16.gmra.mrb[0].mxu0 %v700
    %v806 = vpop.f32.mrb[0].mxu0
    %v807 = vadd.f32 %v722, %v806
    %v808 = vpop.f32.mrb[0].mxu0
    %v809 = vpop.f32.mrb[0].mxu0
    %v810 = vpop.f32.mrb[0].mxu0
    %811 = vdwg.mxu0
    %v812 = vxor.u32 %v807, 2147483648
    %v813 = vmul.f32 %v812, 1.442695
    %v814 = vpow.pop %v813
    %v815 = vadd.f32 %v814, 1.0
    %v816 = vrcp.pop %v815
    %v817 = vmul.f32 1.0, %v816
    %v818 = vpack.c.bf16 %v817, %v817
    %v819 = vld [vmem:[#allocation13] sm:$0xf]
    %v820 = vld [vmem:[#allocation13 + $0x4] sm:$0xf]
    %v821 = vld [vmem:[#allocation13 + $0x8] sm:$0xf]
    %v822 = vld [vmem:[#allocation13 + $0xc] sm:$0xf]
    %v823 = vld [vmem:[#allocation13 + $0x10] sm:$0xf]
    %v824 = vld [vmem:[#allocation13 + $0x14] sm:$0xf]
    %v825 = vld [vmem:[#allocation13 + $0x18] sm:$0xf]
    %v826 = vld [vmem:[#allocation13 + $0x1c] sm:$0xf]
    %v827 = vld [vmem:[#allocation13 + $0x20] sm:$0xf]
    %v828 = vld [vmem:[#allocation13 + $0x24] sm:$0xf]
    %v829 = vld [vmem:[#allocation13 + $0x28] sm:$0xf]
    %v830 = vld [vmem:[#allocation13 + $0x2c] sm:$0xf]
    %v831 = vld [vmem:[#allocation13 + $0x30] sm:$0xf]
    %v832 = vld [vmem:[#allocation13 + $0x34] sm:$0xf]
    %v833 = vld [vmem:[#allocation13 + $0x38] sm:$0xf]
    %v834 = vld [vmem:[#allocation13 + $0x3c] sm:$0xf]
    %v835 = vld [vmem:[%s12] sm:$0x1]
    %v837 = vlaneseq
    %v838 = vshrl.u32 %v837, 7
    %v839 = vsub.s32 0, %v838
    %v840 = vrot.slane %v835, %v839
    %v858 = vunpack.c.l.b16 %v819
    %v859 = vunpack.c.l.b16 %v820
    %v860 = vunpack.c.l.b16 %v821
    %v861 = vunpack.c.l.b16 %v822
    %v862 = vunpack.c.l.b16 %v823
    %v863 = vunpack.c.l.b16 %v824
    %v864 = vunpack.c.l.b16 %v825
    %v865 = vunpack.c.l.b16 %v826
    %v866 = vunpack.c.l.b16 %v827
    %v867 = vunpack.c.l.b16 %v828
    %v868 = vunpack.c.l.b16 %v829
    %v869 = vunpack.c.l.b16 %v830
    %v870 = vunpack.c.l.b16 %v831
    %v871 = vunpack.c.l.b16 %v832
    %v872 = vunpack.c.l.b16 %v833
    %v873 = vunpack.c.l.b16 %v834
    %v874 = vpack.c.b16 %v859, %v858
    %v875 = vpack.c.b16 %v861, %v860
    %v876 = vpack.c.b16 %v863, %v862
    %v877 = vpack.c.b16 %v865, %v864
    %v878 = vpack.c.b16 %v867, %v866
    %v879 = vpack.c.b16 %v869, %v868
    %v880 = vpack.c.b16 %v871, %v870
    %v881 = vpack.c.b16 %v873, %v872
    %890 = vmatprep.subr.bf16.mxu0 0
    %891 = vmatpush1.bf16.msra.mxu0 %v874
    %892 = vmatprep.subr.bf16.mxu0 0
    %893 = vmatpush1.bf16.msra.mxu0 %v875
    %894 = vmatprep.subr.bf16.mxu0 0
    %895 = vmatpush1.bf16.msra.mxu0 %v876
    %896 = vmatprep.subr.bf16.mxu0 0
    %897 = vmatpush1.bf16.msra.mxu0 %v877
    %898 = vmatprep.subr.bf16.mxu0 0
    %899 = vmatpush1.bf16.msra.mxu0 %v878
    %900 = vmatprep.subr.bf16.mxu0 0
    %901 = vmatpush1.bf16.msra.mxu0 %v879
    %902 = vmatprep.subr.bf16.mxu0 0
    %903 = vmatpush1.bf16.msra.mxu0 %v880
    %904 = vmatprep.subr.bf16.mxu0 0
    %905 = vmatpush1.bf16.msra.mxu0 %v881
    %906 = vmatprep.subr.bf16.mxu0 0
    %907 = vmatpush1.bf16.msra.mxu0 0
    %908 = vmatprep.subr.bf16.mxu0 0
    %909 = vmatpush1.bf16.msra.mxu0 0
    %910 = vmatprep.subr.bf16.mxu0 0
    %911 = vmatpush1.bf16.msra.mxu0 0
    %912 = vmatprep.subr.bf16.mxu0 0
    %913 = vmatpush1.bf16.msra.mxu0 0
    %914 = vmatprep.subr.bf16.mxu0 0
    %915 = vmatpush1.bf16.msra.mxu0 0
    %916 = vmatprep.subr.bf16.mxu0 0
    %917 = vmatpush1.bf16.msra.mxu0 0
    %918 = vmatprep.subr.bf16.mxu0 0
    %919 = vmatpush1.bf16.msra.mxu0 0
    %920 = vmatprep.subr.bf16.mxu0 0
    %921 = vmatpush1.bf16.msra.mxu0 0
    %922 = vmatprep.mubr.bf16.mxu0 0
    %923 = vmatmul.mubr.bf16.gmra.mrb[0].mxu0 %v818
    %v924 = vpop.f32.mrb[0].mxu0
    %v925 = vadd.f32 %v840, %v924
    %v926 = vpop.f32.mrb[0].mxu0
    %v927 = vpop.f32.mrb[0].mxu0
    %v928 = vpop.f32.mrb[0].mxu0
    %929 = vdwg.mxu0
    %v930 = vxor.u32 %v925, 2147483648
    %v931 = vmul.f32 %v930, 1.442695
    %v932 = vpow.pop %v931
    %v933 = vadd.f32 %v932, 1.0
    %v934 = vrcp.pop %v933
    %v935 = vmul.f32 1.0, %v934
    %vm936 = vcmask 74752
    %v937 = vsel %vm936, %v935, -inf
    %938 = vmax.xlane.f32.xlu0 %v937
    %v939 = vpop.xlane.xlu0 %938
    %v940 = vsub.f32 %v935, %v939
    %v941 = vmul.f32 %v940, 1.442695
    %v942 = vpow.pop %v941
    %v943 = vsel %vm936, %v942, 0.0
    %944 = vadd.xlane.f32.xlu0 %v943
    %v945 = vpop.xlane.xlu0 %944
    %v946 = vlog2.pop %v945
    %v947 = vmul.f32 %v946, 0.6931472
    %v948 = vsub.f32 %v940, %v947
    %949 = vst.msk [vmem:[#allocation14] sm:$0x3] %vm936, %v948
    // Predicated region
    $region82: #{tpu_custom_call.1} parent=1 // pred_check
      _
    $region83: #{tpu_custom_call.1} parent=1 // pred_check_branch
      %951 = sbr.rel (0) target = $region85
    $region84: #{tpu_custom_call.1} parent=1 // pred_region
      %s953 = ssub.s32 32, 32
      %954 = vsyncadd [#allocation4], %s953
      %s956 = sshll.u32 [#allocation14], 4
      %s957 = int_to_ptr.vmem [resolvable:$true] %s956
      %959 = dma.vmem_to_hbm [thread:$0]  %s957, 32, %s13, [#allocation4]
    $region85: #{tpu_custom_call.1} parent=1 // pred_fallthru
      _
    // Predicated region
    $region86: #{tpu_custom_call.1} parent=1 // pred_check
      _
    $region87: #{tpu_custom_call.1} parent=1 // pred_check_branch
      %961 = sbr.rel (0) target = $region89
    $region88: #{tpu_custom_call.1} parent=1 // pred_region
      %962 = dma.done [#allocation4], 32
    $region89: #{tpu_custom_call.1} parent=1 // pred_fallthru
      _
    %963 = vsyncpa [#allocation3], 1
    %964 = vsyncpa [#allocation6], 1
    %965 = vsyncpa [#allocation9], 1
    %966 = vsyncpa [#allocation12], 1
    %967 = vsyncpa [#allocation4], 1

</llo_original>
